<compile_context>
chip_gen: v5e
topology: v5e:2x2
jax: 0.10.0
libtpu: 0.0.40
codegen_flags: <defaults>
</compile_context>

<pallas_src>
import functools

import jax
import jax.numpy as jnp
from jax.experimental import pallas as pl
from jax.experimental.pallas import tpu as pltpu


def _gelu_new(x):
    # T5 v1.1 "gated-gelu" uses NewGELUActivation == tanh approximation.
    return jax.nn.gelu(x, approximate=True)


def _round_up(x, m):
    return ((x + m - 1) // m) * m


def _sublane(dtype):
    # 8 rows for 4-byte dtypes, 16 for bf16/fp16, 32 for int8/fp8.
    return max(8, 32 // jnp.dtype(dtype).itemsize)


# ----------------------------------------------------------------------------
# Kernel
# ----------------------------------------------------------------------------
def _ffn_kernel(x_ref, w01_ref, wo_ref, o_ref, acc_ref, *, tn):
    """One (token tile, d_ff tile) step of the gated FFN.

    x_ref  : (tm, d_model)          current token tile
    w01_ref: (d_model, 2*tn)        [wi_0 slab | wi_1 slab] (interleaved per tile)
    wo_ref : (tn, d_model)          wo slab
    o_ref  : (tm, d_model)          output tile (written only at last d_ff step)
    acc_ref: (tm, d_model) f32      accumulator across the d_ff axis
    """
    j = pl.program_id(1)

    x = x_ref[...]
    # Fused gate+linear projection: one MXU push, split along lanes (tn is a
    # multiple of 128, so both slices are lane-tile aligned).
    h01 = jnp.dot(x, w01_ref[...], preferred_element_type=jnp.float32)
    hidden_gelu = _gelu_new(h01[:, :tn])
    hidden_linear = h01[:, tn:]
    # dropout: identity (eval). Cast to the wo compute dtype (torch_dtype),
    # matching the reference `hidden_states.to(self.torch_dtype)`.
    h = (hidden_gelu * hidden_linear).astype(wo_ref.dtype)
    contrib = jnp.dot(h, wo_ref[...], preferred_element_type=jnp.float32)

    @pl.when(j == 0)
    def _():
        acc_ref[...] = contrib          # direct write, no zero-fill + add

    @pl.when(j > 0)
    def _():
        acc_ref[...] += contrib

    @pl.when(j == pl.num_programs(1) - 1)
    def _():
        o_ref[...] = acc_ref[...].astype(o_ref.dtype)


# ----------------------------------------------------------------------------
# Tile / hardware selection helpers
# ----------------------------------------------------------------------------
def _tpu_kind_and_vmem():
    """Best-effort (device_kind, per-core VMEM bytes) with safe fallbacks."""
    kind = ""
    try:
        kind = jax.devices()[0].device_kind.lower()
    except Exception:
        pass
    vmem = None
    try:
        vmem = int(getattr(pltpu.get_tpu_info(), "vmem_capacity_bytes", 0)) or None
    except Exception:
        vmem = None
    is_v7 = ("v7" in kind) or ("tpu7" in kind)
    if vmem is None:
        vmem = (64 << 20) if is_v7 else (128 << 20)
    if is_v7:
        vmem = min(vmem, 64 << 20)      # 64 MiB per TensorCore on v7x
    return kind, vmem, is_v7


def _default_tiles(kind, vmem_bytes, is_v7):
    if is_v7 or vmem_bytes <= (64 << 20):
        return 512, 512                 # ~48 MiB resident (bf16, d_model=4096)
    if ("v5 lite" in kind) or ("v5e" in kind) or ("v5lite" in kind):
        return 384, 1024                # v5e is near HBM/MXU balance already
    return 512, 1024                    # v6e / unknown 128 MiB parts


def _pick_token_tile(T, tm_max, sub):
    tm_max = max(_round_up(tm_max, sub), sub)
    if T >= tm_max:
        return tm_max
    return _round_up(T, sub)


def _pick_ff_tile(d_ff, tn_max):
    """Return (tn, d_ff_pad).  tn is lane-aligned; never a full-huge-d_ff slab."""
    if d_ff <= tn_max:
        tn = _round_up(d_ff, 128)       # lane-align the gate/linear split point
        return tn, tn
    # Prefer exact divisors that are multiples of 256 (v6e/v7x MXU), then 128.
    for gran in (256, 128):
        cands = [t for t in range(gran, tn_max + 1, gran) if d_ff % t == 0]
        if cands:
            return max(cands), d_ff
    # No clean divisor: pad d_ff (weights padded with zeros -> exact zeros out).
    tn = max(128, (tn_max // 128) * 128)
    return tn, _round_up(d_ff, tn)


def _vmem_need(tm, tn, d_model, in_bytes, w_bytes, out_bytes):
    return (
        2 * tm * d_model * in_bytes            # x tile (double-buffered)
        + 2 * d_model * (2 * tn) * w_bytes     # w01 slab (double-buffered)
        + 2 * tn * d_model * w_bytes           # wo slab (double-buffered)
        + 2 * tm * d_model * out_bytes         # out tile (double-buffered)
        + tm * d_model * 4                     # f32 accumulator
    )


# ----------------------------------------------------------------------------
# Wrapper
# ----------------------------------------------------------------------------
def t5_dense_gated_act_dense(hidden_states, w0, w1, wo, *, tm=None, tn=None):
    """hidden_states: (B, S, d_model); w0/w1: (d_model, d_ff); wo: (d_ff, d_model)."""
    B, S, d_model = hidden_states.shape
    d_ff = w0.shape[1]
    T = B * S

    in_bytes = jnp.dtype(hidden_states.dtype).itemsize
    w_bytes = jnp.dtype(wo.dtype).itemsize
    out_bytes = in_bytes
    sub = _sublane(hidden_states.dtype)

    kind, vmem_phys, is_v7 = _tpu_kind_and_vmem()
    tm0, tn0 = _default_tiles(kind, vmem_phys, is_v7)
    if tm is not None:
        tm0 = tm
    if tn is not None:
        tn0 = tn

    # Per-core VMEM budget: physical minus headroom for compiler scratch.
    vmem_cap = max(min(int(vmem_phys * 0.85), vmem_phys - (8 << 20)), 32 << 20)

    tm_eff = _pick_token_tile(T, tm0, sub)
    tn_eff, d_ff_pad = _pick_ff_tile(d_ff, tn0)
    # Shrink tiles until the resident estimate fits the budget (tn first —
    # weight slabs dominate — then tm).
    while _vmem_need(tm_eff, tn_eff, d_model, in_bytes, w_bytes, out_bytes) > vmem_cap:
        if tn_eff > 256:
            tn_eff, d_ff_pad = _pick_ff_tile(d_ff, max(256, tn_eff // 2))
        elif tm_eff > 2 * sub:
            tm_eff = _round_up(tm_eff // 2, sub)
        else:
            break

    T_pad = _round_up(T, tm_eff)

    # v7x decode / small-T: a single token tile starves the second TensorCore
    # on the "parallel" axis — split it in two.
    if is_v7 and (T_pad // tm_eff) == 1 and tm_eff >= 2 * sub:
        tm_eff = _round_up((T + 1) // 2, sub)
        T_pad = 2 * tm_eff

    x = hidden_states.reshape(T, d_model)
    if T_pad != T:
        x = jnp.pad(x, ((0, T_pad - T), (0, 0)))   # padded rows compute exact zeros

    # Pad d_ff if needed: zero cols in w0/w1 and zero rows in wo -> exact zeros.
    if d_ff_pad != d_ff:
        w0 = jnp.pad(w0, ((0, 0), (0, d_ff_pad - d_ff)))
        w1 = jnp.pad(w1, ((0, 0), (0, d_ff_pad - d_ff)))
        wo = jnp.pad(wo, ((0, d_ff_pad - d_ff), (0, 0)))

    # Interleave wi_0 / wi_1 per d_ff tile: w01[:, j*2tn : j*2tn+tn]  = w0 tile j,
    #                                        w01[:, j*2tn+tn : (j+1)*2tn] = w1 tile j.
    nt = d_ff_pad // tn_eff
    w01 = jnp.stack(
        [w0.reshape(d_model, nt, tn_eff), w1.reshape(d_model, nt, tn_eff)],
        axis=2,
    ).reshape(d_model, 2 * d_ff_pad)

    grid = (T_pad // tm_eff, nt)

    needed = _vmem_need(tm_eff, tn_eff, d_model, in_bytes, w_bytes, out_bytes)
    vmem_limit = int(min(max(int(needed * 1.25) + (4 << 20), 32 << 20), vmem_cap))

    cost = pl.CostEstimate(
        flops=3 * 2 * T_pad * d_model * d_ff_pad,
        transcendentals=T_pad * d_ff_pad,
        bytes_accessed=(
            grid[0] * 3 * d_model * d_ff_pad * w_bytes   # weights re-read per token tile
            + T_pad * d_model * in_bytes
            + T_pad * d_model * out_bytes
        ),
    )

    kernel = functools.partial(_ffn_kernel, tn=tn_eff)

    out = pl.pallas_call(
        kernel,
        out_shape=jax.ShapeDtypeStruct((T_pad, d_model), hidden_states.dtype),
        grid_spec=pltpu.PrefetchScalarGridSpec(
            num_scalar_prefetch=0,
            grid=grid,
            in_specs=[
                pl.BlockSpec((tm_eff, d_model), lambda i, j: (i, 0)),      # x tile
                pl.BlockSpec((d_model, 2 * tn_eff), lambda i, j: (0, j)),  # [w0|w1] slab
                pl.BlockSpec((tn_eff, d_model), lambda i, j: (j, 0)),      # wo slab
            ],
            out_specs=pl.BlockSpec((tm_eff, d_model), lambda i, j: (i, 0)),
            scratch_shapes=[pltpu.VMEM((tm_eff, d_model), jnp.float32)],
        ),
        compiler_params=pltpu.CompilerParams(
            dimension_semantics=("parallel", "arbitrary"),
            vmem_limit_bytes=vmem_limit,
        ),
        cost_estimate=cost,
    )(x, w01, wo)

    if T_pad != T:
        out = out[:T]
    return out.reshape(B, S, d_model)


def _reference(hidden_states, w0, w1, wo):
    hg = _gelu_new(hidden_states @ w0)
    hl = hidden_states @ w1
    h = (hg * hl).astype(wo.dtype)
    return h @ wo


if __name__ == "__main__":
    # Small shapes consistent with the module: batch=2, seq=8, d_model=32, d_ff=64.
    B, S, d_model, d_ff = 2, 8, 32, 64
    key = jax.random.PRNGKey(0)
    k_x, k_w0, k_w1, k_wo = jax.random.split(key, 4)

    x = jax.random.normal(k_x, (B, S, d_model), dtype=jnp.float32)
    # Deterministic synthetic weights, stored as (in_features, out_features).
    w0 = jax.random.normal(k_w0, (d_model, d_ff), dtype=jnp.float32) * 0.05
    w1 = jax.random.normal(k_w1, (d_model, d_ff), dtype=jnp.float32) * 0.05
    wo = jax.random.normal(k_wo, (d_ff, d_model), dtype=jnp.float32) * 0.05

    fn = jax.jit(t5_dense_gated_act_dense)
    out = jax.block_until_ready(fn(x, w0, w1, wo))

    ref = _reference(x, w0, w1, wo)
    assert out.shape == (B, S, d_model)
    assert jnp.allclose(out, ref, atol=1e-5, rtol=1e-5), "mismatch vs reference"

    print("KERNEL_OK")
</pallas_src>

<mosaic_0001>
module attributes {stable_mosaic.version = 11 : i64} {
  func.func @_ffn_kernel(%arg0: i32, %arg1: i32, %arg2: memref<16x32xf32, #tpu.memory_space<vmem>>, %arg3: memref<32x256xf32, #tpu.memory_space<vmem>>, %arg4: memref<128x32xf32, #tpu.memory_space<vmem>>, %arg5: memref<16x32xf32, #tpu.memory_space<vmem>>, %arg6: memref<16x32xf32, #tpu.memory_space<vmem>>) attributes {dimension_semantics = [#tpu.dimension_semantics<parallel>, #tpu.dimension_semantics<arbitrary>], iteration_bounds = array<i64: 1, 1>, scalar_prefetch = 0 : i64, scratch_operands = 1 : i64, tpu.core_type = #tpu.core_type<tc>, window_params = [{transform_indices = @transform_0, window_bounds = array<i64: 16, 32>}, {transform_indices = @transform_1, window_bounds = array<i64: 32, 256>}, {transform_indices = @transform_2, window_bounds = array<i64: 128, 32>}, {transform_indices = @transform_3, window_bounds = array<i64: 16, 32>}]} {
    %c0 = arith.constant 0 : index
    %c0_0 = arith.constant 0 : index
    %0 = vector.load %arg2[%c0, %c0_0] : memref<16x32xf32, #tpu.memory_space<vmem>>, vector<16x32xf32>
    %c0_1 = arith.constant 0 : index
    %c0_2 = arith.constant 0 : index
    %1 = vector.load %arg3[%c0_1, %c0_2] : memref<32x256xf32, #tpu.memory_space<vmem>>, vector<32x256xf32>
    %cst = arith.constant dense<0.000000e+00> : vector<16x256xf32>
    %2 = tpu.matmul %0, %1, %cst {dimension_numbers = #tpu.dot_dimension_numbers<[1], [0], [0], [1], [0, 0, 1, 1], [], []>} : vector<16x32xf32>, vector<32x256xf32>, vector<16x256xf32> -> vector<16x256xf32>
    %3 = vector.extract_strided_slice %2 {offsets = [0, 0], sizes = [16, 128], strides = [1, 1]} : vector<16x256xf32> to vector<16x128xf32>
    %4 = arith.mulf %3, %3 : vector<16x128xf32>
    %5 = arith.mulf %3, %4 : vector<16x128xf32>
    %cst_3 = arith.constant 4.471500e-02 : f32
    %6 = vector.broadcast %cst_3 : f32 to vector<16x128xf32>
    %7 = arith.mulf %6, %5 : vector<16x128xf32>
    %8 = arith.addf %3, %7 : vector<16x128xf32>
    %cst_4 = arith.constant 0.797884583 : f32
    %9 = vector.broadcast %cst_4 : f32 to vector<16x128xf32>
    %10 = arith.mulf %9, %8 : vector<16x128xf32>
    %11 = math.tanh %10 : vector<16x128xf32>
    %cst_5 = arith.constant 1.000000e+00 : f32
    %12 = vector.broadcast %cst_5 : f32 to vector<16x128xf32>
    %13 = arith.addf %12, %11 : vector<16x128xf32>
    %cst_6 = arith.constant 5.000000e-01 : f32
    %14 = vector.broadcast %cst_6 : f32 to vector<16x128xf32>
    %15 = arith.mulf %14, %13 : vector<16x128xf32>
    %16 = arith.mulf %3, %15 : vector<16x128xf32>
    %17 = vector.extract_strided_slice %2 {offsets = [0, 128], sizes = [16, 128], strides = [1, 1]} : vector<16x256xf32> to vector<16x128xf32>
    %18 = arith.mulf %16, %17 : vector<16x128xf32>
    %c0_7 = arith.constant 0 : index
    %c0_8 = arith.constant 0 : index
    %19 = vector.load %arg4[%c0_7, %c0_8] : memref<128x32xf32, #tpu.memory_space<vmem>>, vector<128x32xf32>
    %cst_9 = arith.constant dense<0.000000e+00> : vector<16x32xf32>
    %20 = tpu.matmul %18, %19, %cst_9 {dimension_numbers = #tpu.dot_dimension_numbers<[1], [0], [0], [1], [0, 0, 1, 1], [], []>} : vector<16x128xf32>, vector<128x32xf32>, vector<16x32xf32> -> vector<16x32xf32>
    %c0_i32 = arith.constant 0 : i32
    %21 = arith.cmpi eq, %arg1, %c0_i32 : i32
    %22 = arith.extui %21 : i1 to i32
    %c0_i32_10 = arith.constant 0 : i32
    %23 = arith.cmpi ne, %22, %c0_i32_10 : i32
    scf.if %23 {
      %c0_15 = arith.constant 0 : index
      %c0_16 = arith.constant 0 : index
      %30 = vector.load %arg6[%c0_15, %c0_16] : memref<16x32xf32, #tpu.memory_space<vmem>>, vector<16x32xf32>
      tpu.vector_store %arg6[%c0_15, %c0_16], %20 {strides = array<i32>} : memref<16x32xf32, #tpu.memory_space<vmem>>, vector<16x32xf32>,
    } else {
    }
    %c0_i32_11 = arith.constant 0 : i32
    %24 = arith.cmpi sgt, %arg1, %c0_i32_11 : i32
    %25 = arith.extui %24 : i1 to i32
    %c0_i32_12 = arith.constant 0 : i32
    %26 = arith.cmpi ne, %25, %c0_i32_12 : i32
    scf.if %26 {
      %c0_15 = arith.constant 0 : index
      %c0_16 = arith.constant 0 : index
      %30 = vector.load %arg6[%c0_15, %c0_16] : memref<16x32xf32, #tpu.memory_space<vmem>>, vector<16x32xf32>
      %31 = arith.addf %30, %20 : vector<16x32xf32>
      %c0_17 = arith.constant 0 : index
      %c0_18 = arith.constant 0 : index
      %32 = vector.load %arg6[%c0_17, %c0_18] : memref<16x32xf32, #tpu.memory_space<vmem>>, vector<16x32xf32>
      tpu.vector_store %arg6[%c0_17, %c0_18], %31 {strides = array<i32>} : memref<16x32xf32, #tpu.memory_space<vmem>>, vector<16x32xf32>,
    } else {
    }
    %c0_i32_13 = arith.constant 0 : i32
    %27 = arith.cmpi eq, %arg1, %c0_i32_13 : i32
    %28 = arith.extui %27 : i1 to i32
    %c0_i32_14 = arith.constant 0 : i32
    %29 = arith.cmpi ne, %28, %c0_i32_14 : i32
    scf.if %29 {
      %c0_15 = arith.constant 0 : index
      %c0_16 = arith.constant 0 : index
      %30 = vector.load %arg6[%c0_15, %c0_16] : memref<16x32xf32, #tpu.memory_space<vmem>>, vector<16x32xf32>
      %c0_17 = arith.constant 0 : index
      %c0_18 = arith.constant 0 : index
      %31 = vector.load %arg5[%c0_17, %c0_18] : memref<16x32xf32, #tpu.memory_space<vmem>>, vector<16x32xf32>
      tpu.vector_store %arg5[%c0_17, %c0_18], %30 {strides = array<i32>} : memref<16x32xf32, #tpu.memory_space<vmem>>, vector<16x32xf32>,
    } else {
    }
    return
  }
  func.func @transform_0(%arg0: i32, %arg1: i32) -> (i32, i32) {
    %c0_i32 = arith.constant 0 : i32
    %c0_i32_0 = arith.constant 0 : i32
    return %arg0, %c0_i32 : i32, i32
  }
  func.func @transform_1(%arg0: i32, %arg1: i32) -> (i32, i32) {
    %c0_i32 = arith.constant 0 : i32
    %c0_i32_0 = arith.constant 0 : i32
    return %c0_i32, %arg1 : i32, i32
  }
  func.func @transform_2(%arg0: i32, %arg1: i32) -> (i32, i32) {
    %c0_i32 = arith.constant 0 : i32
    %c0_i32_0 = arith.constant 0 : i32
    return %arg1, %c0_i32 : i32, i32
  }
  func.func @transform_3(%arg0: i32, %arg1: i32) -> (i32, i32) {
    %c0_i32 = arith.constant 0 : i32
    %c0_i32_0 = arith.constant 0 : i32
    return %arg0, %c0_i32 : i32, i32
  }
}

</mosaic_0001>

<llo_original>
// kernel: t5_dense_gated_act_dense.1
$region0: #{t5_dense_gated_act_dense.1}
  #allocation0 [shape = 'u32[]', space=smem, size = 0x4, offset = 0x4, fixed_abs, tag = 'smem constant byte address 0x4 - core index']
  #allocation1 [shape = 'u32[72,128]{1,0:T(1,128)}', space=vmem, size = 0x9000, scoped, tag = 'internal scratch']
  #allocation2 [shape = 'f32[16,32]{1,0:T(8,128)}', space=vmem, size = 0x2000, scoped, tag = 'scratch operand']
  %s0 = inlined_call_operand.vmem [shape: f32[16,32], index: 0, kind: input, shape index: {}]
  %s1 = inlined_call_operand.vmem [shape: f32[32,256], index: 1, kind: input, shape index: {}]
  %s2 = inlined_call_operand.vmem [shape: f32[128,32], index: 2, kind: input, shape index: {}]
  %s3 = inlined_call_operand.hbm [shape: f32[16,32], index: 3, kind: output, shape index: {}]
  %s4 = sld [smem:[#allocation0]]
  $region34: #{t5_dense_gated_act_dense.1} parent=0
    _
  %s6 = ssub.s32 1, %s4
  %s7 = scalar_select 0, %s6, %s4
  $region1: #{t5_dense_gated_act_dense.1} parent=0
    #allocation3 [shape = 'u8[8192]{0}', space=vmem, size = 0x2000, scoped, tag = 'output window, operand 0, single buffered']
    #allocation4 [shape = 's32[1]{0}', space=sflag, size = 0x4, scoped, tag = 'scoped memory for t5_dense_gated_act_dense.1']
    %8 = vsyncpa [#allocation4], 0
    // Predicated region
    $region2: #{t5_dense_gated_act_dense.1} parent=1 // pred_check
      _
    $region3: #{t5_dense_gated_act_dense.1} parent=1 // pred_check_branch
      %10 = sbr.rel (0) target = $region5
    $region4: #{t5_dense_gated_act_dense.1} parent=1 // pred_region
      _
    $region5: #{t5_dense_gated_act_dense.1} parent=1 // pred_fallthru
      _
    // Predicated region
    $region6: #{t5_dense_gated_act_dense.1} parent=1 // pred_check
      _
    $region7: #{t5_dense_gated_act_dense.1} parent=1 // pred_check_branch
      %12 = sbr.rel (0) target = $region9
    $region8: #{t5_dense_gated_act_dense.1} parent=1 // pred_region
      _
    $region9: #{t5_dense_gated_act_dense.1} parent=1 // pred_fallthru
      _
    // Predicated region
    $region10: #{t5_dense_gated_act_dense.1} parent=1 // pred_check
      _
    $region11: #{t5_dense_gated_act_dense.1} parent=1 // pred_check_branch
      %14 = sbr.rel (0) target = $region13
    $region12: #{t5_dense_gated_act_dense.1} parent=1 // pred_region
      _
    $region13: #{t5_dense_gated_act_dense.1} parent=1 // pred_fallthru
      _
    %v15 = vld [vmem:[%s0] sm:$0xff]
    %v16 = vld [vmem:[%s0 + $0x8] sm:$0xff]
    %v17 = vld [vmem:[%s1] sm:$0xff]
    %v18 = vld [vmem:[%s1 + $0x8] sm:$0xff]
    %v19 = vld [vmem:[%s1 + $0x10] sm:$0xff]
    %v20 = vld [vmem:[%s1 + $0x18] sm:$0xff]
    %v21 = vld [vmem:[%s1 + $0x20] sm:$0xff]
    %v22 = vld [vmem:[%s1 + $0x28] sm:$0xff]
    %v23 = vld [vmem:[%s1 + $0x30] sm:$0xff]
    %v24 = vld [vmem:[%s1 + $0x38] sm:$0xff]
    %vm25 = vcmask 261120
    %v27 = vsel %vm25, %v15, 0
    %v30 = vsel %vm25, %v16, 0
    %32 = vmatpush.msra.mxu0 0.0
    %33 = vmatpush.msra.mxu0 0.0
    %34 = vmatpush.msra.mxu0 0.0
    %35 = vmatpush.msra.mxu0 0.0
    %36 = vmatpush.msra.mxu0 0.0
    %37 = vmatpush.msra.mxu0 0.0
    %38 = vmatpush.msra.mxu0 0.0
    %39 = vmatpush.msra.mxu0 0.0
    %40 = vmatpush.msra.mxu0 0.0
    %41 = vmatpush.msra.mxu0 0.0
    %42 = vmatpush.msra.mxu0 0.0
    %43 = vmatpush.msra.mxu0 0.0
    %44 = vmatpush.msra.mxu0 %v23
    %45 = vmatpush.msra.mxu0 %v21
    %46 = vmatpush.msra.mxu0 %v19
    %47 = vmatpush.msra.mxu0 %v17
    %48 = vmatmul.f32.gmra.mxu0 %v27
    %v49 = vpop.f32.mrf.mxu0
    %v50 = vadd.f32 0.0, %v49
    %51 = vmatmul.f32.gmra.mxu0 %v30
    %v52 = vpop.f32.mrf.mxu0
    %v53 = vadd.f32 0.0, %v52
    %54 = vdwg.mxu0
    %55 = vmatpush.msra.mxu0 0.0
    %56 = vmatpush.msra.mxu0 0.0
    %57 = vmatpush.msra.mxu0 0.0
    %58 = vmatpush.msra.mxu0 0.0
    %59 = vmatpush.msra.mxu0 0.0
    %60 = vmatpush.msra.mxu0 0.0
    %61 = vmatpush.msra.mxu0 0.0
    %62 = vmatpush.msra.mxu0 0.0
    %63 = vmatpush.msra.mxu0 0.0
    %64 = vmatpush.msra.mxu0 0.0
    %65 = vmatpush.msra.mxu0 0.0
    %66 = vmatpush.msra.mxu0 0.0
    %67 = vmatpush.msra.mxu0 %v24
    %68 = vmatpush.msra.mxu0 %v22
    %69 = vmatpush.msra.mxu0 %v20
    %70 = vmatpush.msra.mxu0 %v18
    %71 = vmatmul.f32.gmra.mxu0 %v27
    %v72 = vpop.f32.mrf.mxu0
    %v73 = vadd.f32 0.0, %v72
    %74 = vmatmul.f32.gmra.mxu0 %v30
    %v75 = vpop.f32.mrf.mxu0
    %v76 = vadd.f32 0.0, %v75
    %77 = vdwg.mxu0
    %v78 = vmul.f32 %v50, %v50
    %v79 = vmul.f32 %v53, %v53
    %v80 = vmul.f32 %v50, %v78
    %v81 = vmul.f32 %v53, %v79
    %v82 = vmul.f32 %v80, 0.044715
    %v83 = vmul.f32 %v81, 0.044715
    %v84 = vadd.f32 %v50, %v82
    %v85 = vadd.f32 %v53, %v83
    %v86 = vmul.f32 %v84, 0.7978846
    %v87 = vmul.f32 %v85, 0.7978846
    %v88 = vtanh.pop %v86
    %v89 = vtanh.pop %v87
    %v90 = vadd.f32 %v88, 1.0
    %v91 = vadd.f32 %v89, 1.0
    %v92 = vmul.f32 %v90, 0.5
    %v93 = vmul.f32 %v91, 0.5
    %v94 = vmul.f32 %v50, %v92
    %v95 = vmul.f32 %v53, %v93
    %v96 = vmul.f32 %v94, %v73
    %v97 = vmul.f32 %v95, %v76
    %v98 = vld [vmem:[%s2] sm:$0xff]
    %v99 = vld [vmem:[%s2 + $0x8] sm:$0xff]
    %v100 = vld [vmem:[%s2 + $0x10] sm:$0xff]
    %v101 = vld [vmem:[%s2 + $0x18] sm:$0xff]
    %v102 = vld [vmem:[%s2 + $0x20] sm:$0xff]
    %v103 = vld [vmem:[%s2 + $0x28] sm:$0xff]
    %v104 = vld [vmem:[%s2 + $0x30] sm:$0xff]
    %v105 = vld [vmem:[%s2 + $0x38] sm:$0xff]
    %v106 = vld [vmem:[%s2 + $0x40] sm:$0xff]
    %v107 = vld [vmem:[%s2 + $0x48] sm:$0xff]
    %v108 = vld [vmem:[%s2 + $0x50] sm:$0xff]
    %v109 = vld [vmem:[%s2 + $0x58] sm:$0xff]
    %v110 = vld [vmem:[%s2 + $0x60] sm:$0xff]
    %v111 = vld [vmem:[%s2 + $0x68] sm:$0xff]
    %v112 = vld [vmem:[%s2 + $0x70] sm:$0xff]
    %v113 = vld [vmem:[%s2 + $0x78] sm:$0xff]
    %114 = vmatpush.msra.mxu0 %v113
    %115 = vmatpush.msra.mxu0 %v112
    %116 = vmatpush.msra.mxu0 %v111
    %117 = vmatpush.msra.mxu0 %v110
    %118 = vmatpush.msra.mxu0 %v109
    %119 = vmatpush.msra.mxu0 %v108
    %120 = vmatpush.msra.mxu0 %v107
    %121 = vmatpush.msra.mxu0 %v106
    %122 = vmatpush.msra.mxu0 %v105
    %123 = vmatpush.msra.mxu0 %v104
    %124 = vmatpush.msra.mxu0 %v103
    %125 = vmatpush.msra.mxu0 %v102
    %126 = vmatpush.msra.mxu0 %v101
    %127 = vmatpush.msra.mxu0 %v100
    %128 = vmatpush.msra.mxu0 %v99
    %129 = vmatpush.msra.mxu0 %v98
    %130 = vmatmul.f32.gmra.mxu0 %v96
    %v131 = vpop.f32.mrf.mxu0
    %v132 = vadd.f32 0.0, %v131
    %133 = vmatmul.f32.gmra.mxu0 %v97
    %v134 = vpop.f32.mrf.mxu0
    %v135 = vadd.f32 0.0, %v134
    %136 = vdwg.mxu0
    %p137 = scmp.eq.s32.totalorder 0, 0
    // Predicated region
    $region14: #{t5_dense_gated_act_dense.1} parent=1 // pred_check
      %p138 = pneg %p137
    $region15: #{t5_dense_gated_act_dense.1} parent=1 // pred_check_branch
      %140 = sbr.rel (%p138) target = $region17
    $region16: #{t5_dense_gated_act_dense.1} parent=1 // pred_region
      %141 = vst.msk [vmem:[#allocation2] sm:$0xff] %vm25, %v132
      %142 = vst.msk [vmem:[#allocation2 + $0x8] sm:$0xff] %vm25, %v135
    $region17: #{t5_dense_gated_act_dense.1} parent=1 // pred_fallthru
      _
    %p143 = scmp.gt.s32.totalorder 0, 0
    // Predicated region
    $region18: #{t5_dense_gated_act_dense.1} parent=1 // pred_check
      %p144 = pneg %p143
    $region19: #{t5_dense_gated_act_dense.1} parent=1 // pred_check_branch
      %146 = sbr.rel (%p144) target = $region21
    $region20: #{t5_dense_gated_act_dense.1} parent=1 // pred_region
      %v147 = vld [vmem:[#allocation2] sm:$0xff]
      %v148 = vld [vmem:[#allocation2 + $0x8] sm:$0xff]
      %v149 = vadd.f32 %v147, %v132
      %v150 = vadd.f32 %v148, %v135
      %151 = vst.msk [vmem:[#allocation2] sm:$0xff] %vm25, %v149
      %152 = vst.msk [vmem:[#allocation2 + $0x8] sm:$0xff] %vm25, %v150
    $region21: #{t5_dense_gated_act_dense.1} parent=1 // pred_fallthru
      _
    // Predicated region
    $region22: #{t5_dense_gated_act_dense.1} parent=1 // pred_check
      %p153 = pneg %p137
    $region23: #{t5_dense_gated_act_dense.1} parent=1 // pred_check_branch
      %155 = sbr.rel (%p153) target = $region25
    $region24: #{t5_dense_gated_act_dense.1} parent=1 // pred_region
      %v156 = vld [vmem:[#allocation2] sm:$0xff]
      %v157 = vld [vmem:[#allocation2 + $0x8] sm:$0xff]
      %158 = vst.msk [vmem:[#allocation3] sm:$0xff] %vm25, %v156
      %159 = vst.msk [vmem:[#allocation3 + $0x8] sm:$0xff] %vm25, %v157
    $region25: #{t5_dense_gated_act_dense.1} parent=1 // pred_fallthru
      _
    // Predicated region
    $region26: #{t5_dense_gated_act_dense.1} parent=1 // pred_check
      _
    $region27: #{t5_dense_gated_act_dense.1} parent=1 // pred_check_branch
      %161 = sbr.rel (0) target = $region29
    $region28: #{t5_dense_gated_act_dense.1} parent=1 // pred_region
      %163 = vsyncadd [#allocation4], 0
      %s164 = sshll.u32 [#allocation3], 4
      %s165 = int_to_ptr.vmem [resolvable:$true] %s164
      %s166 = sshll.u32 %s3, 4
      %s167 = int_to_ptr.hbm [resolvable:$true] %s166
      %172 = dma.vmem_to_hbm [thread:$0]  %s165, 256, %s167, [#allocation4], 128, 128, 8
    $region29: #{t5_dense_gated_act_dense.1} parent=1 // pred_fallthru
      _
    // Predicated region
    $region30: #{t5_dense_gated_act_dense.1} parent=1 // pred_check
      _
    $region31: #{t5_dense_gated_act_dense.1} parent=1 // pred_check_branch
      %174 = sbr.rel (0) target = $region33
    $region32: #{t5_dense_gated_act_dense.1} parent=1 // pred_region
      %176 = dma.done [#allocation4], 256
    $region33: #{t5_dense_gated_act_dense.1} parent=1 // pred_fallthru
      _
    %177 = vsyncpa [#allocation4], 1

</llo_original>
